<compile_context>
chip_gen: v7x
topology: tpu7x:2x2x1
jax: 0.10.0
libtpu: 0.0.40
codegen_flags: <defaults>
</compile_context>

<pallas_src>
import functools

import jax
import jax.numpy as jnp
from jax.experimental import pallas as pl
from jax.experimental.pallas import tpu as pltpu

IN_DIM = 32    # input feature dim
HID_DIM = 64   # hidden dim
EMB_DIM = 16   # embedding dim


def _siamese_mlp_kernel(x1_ref, x2_ref, w1_ref, w2_ref, w3_ref, b_ref,
                        o1_ref, o2_ref):
    """One batch tile: runs the shared embedding MLP on both branches."""
    # Shared weights: constant index_maps keep these blocks VMEM-resident
    # across grid steps (no per-step weight DMA).
    w1 = w1_ref[...]
    w2 = w2_ref[...]
    w3 = w3_ref[...]
    # Biases arrive packed in one (3, HID_DIM) f32 slab; row 2 is zero-padded
    # past EMB_DIM.  Static slices only — no gathers.
    b1 = b_ref[0:1, :]
    b2 = b_ref[1:2, :]
    b3 = b_ref[2:3, :][:, :EMB_DIM]

    def branch(x_ref, o_ref):
        # Straight 3-dot chain per branch, stored directly into its output
        # ref (no concat of the two branches, no row slicing of a fused slab).
        x = x_ref[...].astype(w1.dtype)
        h1 = jnp.dot(x, w1, preferred_element_type=jnp.float32) + b1
        h1 = jnp.maximum(h1, 0.0)
        h2 = jnp.dot(h1.astype(w2.dtype), w2,
                     preferred_element_type=jnp.float32) + b2
        h2 = jnp.maximum(h2, 0.0)
        out = jnp.dot(h2.astype(w3.dtype), w3,
                      preferred_element_type=jnp.float32) + b3
        o_ref[...] = out.astype(o_ref.dtype)

    branch(x1_ref, o1_ref)
    branch(x2_ref, o2_ref)


def init_params(key):
    """Deterministic Kaiming-style init for the synthetic embedding MLP."""
    k1, k2, k3, k4, k5, k6 = jax.random.split(key, 6)
    w1 = jax.random.normal(k1, (IN_DIM, HID_DIM), jnp.float32) * (2.0 / IN_DIM) ** 0.5
    b1 = jax.random.normal(k4, (HID_DIM,), jnp.float32) * 0.1
    w2 = jax.random.normal(k2, (HID_DIM, HID_DIM), jnp.float32) * (2.0 / HID_DIM) ** 0.5
    b2 = jax.random.normal(k5, (HID_DIM,), jnp.float32) * 0.1
    w3 = jax.random.normal(k3, (HID_DIM, EMB_DIM), jnp.float32) * (2.0 / HID_DIM) ** 0.5
    b3 = jax.random.normal(k6, (EMB_DIM,), jnp.float32) * 0.1
    return (w1, b1, w2, b2, w3, b3)


def pack_params(params, dot_dtype=jnp.float32):
    """Pack the 6 raw params into 4 kernel operands (done once, off the hot path).

    Weights are cast to `dot_dtype` (bf16 => single-pass MXU matmuls on
    v6e/v7x and half the weight DMA bytes); the three biases are packed into
    one (3, HID_DIM) f32 slab so the call binds one operand instead of three
    tiny (8,128)-padded ones.  Dots always accumulate in f32.
    """
    w1, b1, w2, b2, w3, b3 = params
    b = jnp.zeros((3, HID_DIM), jnp.float32)
    b = b.at[0, :].set(b1.reshape(-1))
    b = b.at[1, :].set(b2.reshape(-1))
    b = b.at[2, :EMB_DIM].set(b3.reshape(-1))
    return (w1.astype(dot_dtype), w2.astype(dot_dtype), w3.astype(dot_dtype), b)


@functools.partial(jax.jit, static_argnames=("block_batch",))
def siamese_forward(x1, x2, packed_params, *, block_batch=128):
    """SiameseNet.forward: returns (output1, output2), each (batch, EMB_DIM).

    The batch dimension is tiled with a 1-D grid (block_batch rows per step)
    so many siamese pairs can be pushed through one pallas_call; weights stay
    VMEM-resident across steps via constant index_maps.
    """
    w1, w2, w3, b = packed_params
    batch, in_dim = x1.shape
    assert x2.shape == x1.shape, "x1/x2 must have the same shape"
    tm = min(block_batch, batch)
    if batch % tm != 0:
        raise ValueError(f"batch ({batch}) must be divisible by the batch tile ({tm})")
    grid = (batch // tm,)

    x_spec = pl.BlockSpec((tm, in_dim), lambda i: (i, 0))
    o_spec = pl.BlockSpec((tm, EMB_DIM), lambda i: (i, 0))
    # Constant-index, whole-array (VMEM-resident) specs for the shared params.
    w_specs = [pl.BlockSpec(w.shape, lambda i: (0, 0)) for w in (w1, w2, w3, b)]

    out1, out2 = pl.pallas_call(
        _siamese_mlp_kernel,
        out_shape=(
            jax.ShapeDtypeStruct((batch, EMB_DIM), jnp.float32),
            jax.ShapeDtypeStruct((batch, EMB_DIM), jnp.float32),
        ),
        grid=grid,
        in_specs=[x_spec, x_spec] + w_specs,
        out_specs=(o_spec, o_spec),
        # Batch-tile axis is embarrassingly parallel -> megacore sharding on
        # v7x; harmless on single-TC v5e/v6e.  Total resident data is tiny,
        # so no vmem_limit_bytes override is needed on any generation.
        compiler_params=pltpu.CompilerParams(
            dimension_semantics=("parallel",),
        ),
    )(x1, x2, w1, w2, w3, b)
    return out1, out2


def _reference_forward(x1, x2, params):
    """Pure-JAX f32 reference for correctness checking."""
    w1, b1, w2, b2, w3, b3 = params

    def emb(x):
        h1 = jnp.maximum(x @ w1 + b1, 0.0)
        h2 = jnp.maximum(h1 @ w2 + b2, 0.0)
        return h2 @ w3 + b3

    return emb(x1), emb(x2)


if __name__ == "__main__":
    key = jax.random.PRNGKey(0)
    kp, kx1, kx2, kbx1, kbx2 = jax.random.split(key, 5)

    params = init_params(kp)

    # --- Small shape, f32 MXU path (matches the module's native usage). ----
    batch = 8
    x1 = jax.random.normal(kx1, (batch, IN_DIM), jnp.float32)
    x2 = jax.random.normal(kx2, (batch, IN_DIM), jnp.float32)
    packed_f32 = pack_params(params, dot_dtype=jnp.float32)

    out1, out2 = siamese_forward(x1, x2, packed_f32)
    jax.block_until_ready((out1, out2))

    ref1, ref2 = _reference_forward(x1, x2, params)
    assert out1.shape == (batch, EMB_DIM) and out2.shape == (batch, EMB_DIM)
    assert jnp.allclose(out1, ref1, atol=1e-5, rtol=1e-5)
    assert jnp.allclose(out2, ref2, atol=1e-5, rtol=1e-5)

    # --- Batched-pairs path: grid over batch tiles, resident weights, bf16
    # dots (single-pass MXU on v6e/v7x) with f32 accumulation. -------------
    big_batch = 256
    bx1 = jax.random.normal(kbx1, (big_batch, IN_DIM), jnp.float32)
    bx2 = jax.random.normal(kbx2, (big_batch, IN_DIM), jnp.float32)
    packed_bf16 = pack_params(params, dot_dtype=jnp.bfloat16)

    bo1, bo2 = siamese_forward(bx1, bx2, packed_bf16, block_batch=128)
    jax.block_until_ready((bo1, bo2))

    bref1, bref2 = _reference_forward(bx1, bx2, params)
    assert bo1.shape == (big_batch, EMB_DIM) and bo2.shape == (big_batch, EMB_DIM)
    # bf16 operands => relaxed tolerance (per review correctness note).
    assert jnp.allclose(bo1, bref1, atol=1e-1, rtol=1e-1)
    assert jnp.allclose(bo2, bref2, atol=1e-1, rtol=1e-1)

    print("KERNEL_OK")
</pallas_src>

<mosaic_0001>
module attributes {stable_mosaic.version = 11 : i64} {
  func.func @_siamese_mlp_kernel(%arg0: i32, %arg1: memref<8x32xf32, #tpu.memory_space<vmem>>, %arg2: memref<8x32xf32, #tpu.memory_space<vmem>>, %arg3: memref<32x64xf32, #tpu.memory_space<vmem>>, %arg4: memref<64x64xf32, #tpu.memory_space<vmem>>, %arg5: memref<64x16xf32, #tpu.memory_space<vmem>>, %arg6: memref<3x64xf32, #tpu.memory_space<vmem>>, %arg7: memref<8x16xf32, #tpu.memory_space<vmem>>, %arg8: memref<8x16xf32, #tpu.memory_space<vmem>>) attributes {dimension_semantics = [#tpu.dimension_semantics<parallel>], iteration_bounds = array<i64: 1>, scalar_prefetch = 0 : i64, scratch_operands = 0 : i64, tpu.core_type = #tpu.core_type<tc>, window_params = [{transform_indices = @transform_0, window_bounds = array<i64: 8, 32>}, {transform_indices = @transform_1, window_bounds = array<i64: 8, 32>}, {pipeline_mode = #tpu.pipeline_mode<synchronous>, transform_indices = @transform_2, window_bounds = array<i64: 32, 64>}, {pipeline_mode = #tpu.pipeline_mode<synchronous>, transform_indices = @transform_3, window_bounds = array<i64: 64, 64>}, {pipeline_mode = #tpu.pipeline_mode<synchronous>, transform_indices = @transform_4, window_bounds = array<i64: 64, 16>}, {pipeline_mode = #tpu.pipeline_mode<synchronous>, transform_indices = @transform_5, window_bounds = array<i64: 3, 64>}, {transform_indices = @transform_6, window_bounds = array<i64: 8, 16>}, {transform_indices = @transform_7, window_bounds = array<i64: 8, 16>}]} {
    %c0 = arith.constant 0 : index
    %c0_0 = arith.constant 0 : index
    %0 = vector.load %arg3[%c0, %c0_0] : memref<32x64xf32, #tpu.memory_space<vmem>>, vector<32x64xf32>
    %c0_1 = arith.constant 0 : index
    %c0_2 = arith.constant 0 : index
    %1 = vector.load %arg4[%c0_1, %c0_2] : memref<64x64xf32, #tpu.memory_space<vmem>>, vector<64x64xf32>
    %c0_3 = arith.constant 0 : index
    %c0_4 = arith.constant 0 : index
    %2 = vector.load %arg5[%c0_3, %c0_4] : memref<64x16xf32, #tpu.memory_space<vmem>>, vector<64x16xf32>
    %c0_5 = arith.constant 0 : index
    %c0_6 = arith.constant 0 : index
    %3 = vector.load %arg6[%c0_5, %c0_6] : memref<3x64xf32, #tpu.memory_space<vmem>>, vector<1x64xf32>
    %c1 = arith.constant 1 : index
    %c0_7 = arith.constant 0 : index
    %4 = vector.load %arg6[%c1, %c0_7] : memref<3x64xf32, #tpu.memory_space<vmem>>, vector<1x64xf32>
    %c2 = arith.constant 2 : index
    %c0_8 = arith.constant 0 : index
    %5 = vector.load %arg6[%c2, %c0_8] : memref<3x64xf32, #tpu.memory_space<vmem>>, vector<1x64xf32>
    %6 = vector.extract_strided_slice %5 {offsets = [0, 0], sizes = [1, 16], strides = [1, 1]} : vector<1x64xf32> to vector<1x16xf32>
    %c0_9 = arith.constant 0 : index
    %c0_10 = arith.constant 0 : index
    %7 = vector.load %arg1[%c0_9, %c0_10] : memref<8x32xf32, #tpu.memory_space<vmem>>, vector<8x32xf32>
    %cst = arith.constant dense<0.000000e+00> : vector<8x64xf32>
    %8 = tpu.matmul %7, %0, %cst {dimension_numbers = #tpu.dot_dimension_numbers<[1], [0], [0], [1], [0, 0, 1, 1], [], []>} : vector<8x32xf32>, vector<32x64xf32>, vector<8x64xf32> -> vector<8x64xf32>
    %9 = vector.broadcast %3 : vector<1x64xf32> to vector<8x64xf32>
    %10 = arith.addf %8, %9 : vector<8x64xf32>
    %cst_11 = arith.constant 0.000000e+00 : f32
    %11 = vector.broadcast %cst_11 : f32 to vector<8x64xf32>
    %12 = arith.maximumf %10, %11 : vector<8x64xf32>
    %cst_12 = arith.constant dense<0.000000e+00> : vector<8x64xf32>
    %13 = tpu.matmul %12, %1, %cst_12 {dimension_numbers = #tpu.dot_dimension_numbers<[1], [0], [0], [1], [0, 0, 1, 1], [], []>} : vector<8x64xf32>, vector<64x64xf32>, vector<8x64xf32> -> vector<8x64xf32>
    %14 = vector.broadcast %4 : vector<1x64xf32> to vector<8x64xf32>
    %15 = arith.addf %13, %14 : vector<8x64xf32>
    %cst_13 = arith.constant 0.000000e+00 : f32
    %16 = vector.broadcast %cst_13 : f32 to vector<8x64xf32>
    %17 = arith.maximumf %15, %16 : vector<8x64xf32>
    %cst_14 = arith.constant dense<0.000000e+00> : vector<8x16xf32>
    %18 = tpu.matmul %17, %2, %cst_14 {dimension_numbers = #tpu.dot_dimension_numbers<[1], [0], [0], [1], [0, 0, 1, 1], [], []>} : vector<8x64xf32>, vector<64x16xf32>, vector<8x16xf32> -> vector<8x16xf32>
    %19 = vector.broadcast %6 : vector<1x16xf32> to vector<8x16xf32>
    %20 = arith.addf %18, %19 : vector<8x16xf32>
    %c0_15 = arith.constant 0 : index
    %c0_16 = arith.constant 0 : index
    %21 = vector.load %arg7[%c0_15, %c0_16] : memref<8x16xf32, #tpu.memory_space<vmem>>, vector<8x16xf32>
    tpu.vector_store %arg7[%c0_15, %c0_16], %20 {strides = array<i32>} : memref<8x16xf32, #tpu.memory_space<vmem>>, vector<8x16xf32>,
    %c0_17 = arith.constant 0 : index
    %c0_18 = arith.constant 0 : index
    %22 = vector.load %arg2[%c0_17, %c0_18] : memref<8x32xf32, #tpu.memory_space<vmem>>, vector<8x32xf32>
    %cst_19 = arith.constant dense<0.000000e+00> : vector<8x64xf32>
    %23 = tpu.matmul %22, %0, %cst_19 {dimension_numbers = #tpu.dot_dimension_numbers<[1], [0], [0], [1], [0, 0, 1, 1], [], []>} : vector<8x32xf32>, vector<32x64xf32>, vector<8x64xf32> -> vector<8x64xf32>
    %24 = vector.broadcast %3 : vector<1x64xf32> to vector<8x64xf32>
    %25 = arith.addf %23, %24 : vector<8x64xf32>
    %cst_20 = arith.constant 0.000000e+00 : f32
    %26 = vector.broadcast %cst_20 : f32 to vector<8x64xf32>
    %27 = arith.maximumf %25, %26 : vector<8x64xf32>
    %cst_21 = arith.constant dense<0.000000e+00> : vector<8x64xf32>
    %28 = tpu.matmul %27, %1, %cst_21 {dimension_numbers = #tpu.dot_dimension_numbers<[1], [0], [0], [1], [0, 0, 1, 1], [], []>} : vector<8x64xf32>, vector<64x64xf32>, vector<8x64xf32> -> vector<8x64xf32>
    %29 = vector.broadcast %4 : vector<1x64xf32> to vector<8x64xf32>
    %30 = arith.addf %28, %29 : vector<8x64xf32>
    %cst_22 = arith.constant 0.000000e+00 : f32
    %31 = vector.broadcast %cst_22 : f32 to vector<8x64xf32>
    %32 = arith.maximumf %30, %31 : vector<8x64xf32>
    %cst_23 = arith.constant dense<0.000000e+00> : vector<8x16xf32>
    %33 = tpu.matmul %32, %2, %cst_23 {dimension_numbers = #tpu.dot_dimension_numbers<[1], [0], [0], [1], [0, 0, 1, 1], [], []>} : vector<8x64xf32>, vector<64x16xf32>, vector<8x16xf32> -> vector<8x16xf32>
    %34 = vector.broadcast %6 : vector<1x16xf32> to vector<8x16xf32>
    %35 = arith.addf %33, %34 : vector<8x16xf32>
    %c0_24 = arith.constant 0 : index
    %c0_25 = arith.constant 0 : index
    %36 = vector.load %arg8[%c0_24, %c0_25] : memref<8x16xf32, #tpu.memory_space<vmem>>, vector<8x16xf32>
    tpu.vector_store %arg8[%c0_24, %c0_25], %35 {strides = array<i32>} : memref<8x16xf32, #tpu.memory_space<vmem>>, vector<8x16xf32>,
    return
  }
  func.func @transform_0(%arg0: i32) -> (i32, i32) {
    %c0_i32 = arith.constant 0 : i32
    %c0_i32_0 = arith.constant 0 : i32
    return %arg0, %c0_i32 : i32, i32
  }
  func.func @transform_1(%arg0: i32) -> (i32, i32) {
    %c0_i32 = arith.constant 0 : i32
    %c0_i32_0 = arith.constant 0 : i32
    return %arg0, %c0_i32 : i32, i32
  }
  func.func @transform_2(%arg0: i32) -> (i32, i32) {
    %c0_i32 = arith.constant 0 : i32
    %c0_i32_0 = arith.constant 0 : i32
    %c0_i32_1 = arith.constant 0 : i32
    return %c0_i32, %c0_i32_0 : i32, i32
  }
  func.func @transform_3(%arg0: i32) -> (i32, i32) {
    %c0_i32 = arith.constant 0 : i32
    %c0_i32_0 = arith.constant 0 : i32
    %c0_i32_1 = arith.constant 0 : i32
    return %c0_i32, %c0_i32_0 : i32, i32
  }
  func.func @transform_4(%arg0: i32) -> (i32, i32) {
    %c0_i32 = arith.constant 0 : i32
    %c0_i32_0 = arith.constant 0 : i32
    %c0_i32_1 = arith.constant 0 : i32
    return %c0_i32, %c0_i32_0 : i32, i32
  }
  func.func @transform_5(%arg0: i32) -> (i32, i32) {
    %c0_i32 = arith.constant 0 : i32
    %c0_i32_0 = arith.constant 0 : i32
    %c0_i32_1 = arith.constant 0 : i32
    return %c0_i32, %c0_i32_0 : i32, i32
  }
  func.func @transform_6(%arg0: i32) -> (i32, i32) {
    %c0_i32 = arith.constant 0 : i32
    %c0_i32_0 = arith.constant 0 : i32
    return %arg0, %c0_i32 : i32, i32
  }
  func.func @transform_7(%arg0: i32) -> (i32, i32) {
    %c0_i32 = arith.constant 0 : i32
    %c0_i32_0 = arith.constant 0 : i32
    return %arg0, %c0_i32 : i32, i32
  }
}

</mosaic_0001>

<llo_original>
// kernel: siamese_forward.1
$region0: #{siamese_forward.1}
  #allocation0 [shape = 'u32[]', space=smem, size = 0x4, offset = 0x4, fixed_abs, tag = 'smem constant byte address 0x4 - core index']
  #allocation1 [shape = 'u32[144,128]{1,0:T(1,128)}', space=vmem, size = 0x12000, scoped, tag = 'internal scratch']
  %s0 = inlined_call_operand.vmem [shape: f32[8,32], index: 0, kind: input, shape index: {}]
  %s1 = inlined_call_operand.vmem [shape: f32[8,32], index: 1, kind: input, shape index: {}]
  %s2 = inlined_call_operand.hbm [shape: f32[32,64], index: 2, kind: input, shape index: {}]
  %s3 = inlined_call_operand.vmem [shape: f32[64,64], index: 3, kind: input, shape index: {}]
  %s4 = inlined_call_operand.vmem [shape: f32[64,16], index: 4, kind: input, shape index: {}]
  %s5 = inlined_call_operand.vmem [shape: f32[3,64], index: 5, kind: input, shape index: {}]
  %s6 = inlined_call_operand.hbm [shape: f32[8,16], index: 6, kind: output, shape index: {0}]
  %s7 = inlined_call_operand.hbm [shape: f32[8,16], index: 7, kind: output, shape index: {1}]
  %8 = xla_tuple %s6, %s7
  %s9 = sld [smem:[#allocation0]]
  $region46: #{siamese_forward.1} parent=0
    _
  %s11 = ssub.s32 1, %s9
  %s12 = scalar_select 0, %s11, %s9
  $region1: #{siamese_forward.1} parent=0
    #allocation2 [shape = 'u8[16384]{0}', space=vmem, size = 0x4000, scoped, tag = 'input window, operand 2, single buffered']
    #allocation3 [shape = 's32[1]{0}', space=sflag, size = 0x4, scoped, tag = 'scoped memory for siamese_forward.1']
    #allocation4 [shape = 's32[1]{0}', space=sflag, size = 0x4, scoped, tag = 'scoped memory for siamese_forward.1']
    #allocation5 [shape = 'u8[4096]{0}', space=vmem, size = 0x1000, scoped, tag = 'output window, operand 0, single buffered']
    #allocation6 [shape = 'u8[4096]{0}', space=vmem, size = 0x1000, scoped, tag = 'output window, operand 1, single buffered']
    #allocation7 [shape = 's32[1]{0}', space=sflag, size = 0x4, scoped, tag = 'scoped memory for siamese_forward.1']
    %13 = vsyncpa [#allocation3], 0
    %14 = vsyncpa [#allocation4], 0
    %15 = vsyncpa [#allocation7], 0
    // Predicated region
    $region2: #{siamese_forward.1} parent=1 // pred_check
      _
    $region3: #{siamese_forward.1} parent=1 // pred_check_branch
      %17 = sbr.rel (0) target = $region5
    $region4: #{siamese_forward.1} parent=1 // pred_region
      _
    $region5: #{siamese_forward.1} parent=1 // pred_fallthru
      _
    // Predicated region
    $region6: #{siamese_forward.1} parent=1 // pred_check
      _
    $region7: #{siamese_forward.1} parent=1 // pred_check_branch
      %19 = sbr.rel (0) target = $region9
    $region8: #{siamese_forward.1} parent=1 // pred_region
      _
    $region9: #{siamese_forward.1} parent=1 // pred_fallthru
      _
    // Predicated region
    $region10: #{siamese_forward.1} parent=1 // pred_check
      _
    $region11: #{siamese_forward.1} parent=1 // pred_check_branch
      %21 = sbr.rel (0) target = $region13
    $region12: #{siamese_forward.1} parent=1 // pred_region
      %s23 = ssub.s32 512, 512
      %24 = vsyncadd [#allocation3], %s23
      %s25 = sshll.u32 [#allocation2], 4
      %s26 = int_to_ptr.vmem [resolvable:$true] %s25
      %31 = dma.hbm_to_vmem [thread:$0]  %s2, 512, %s26, [#allocation3], 128, 128, 8
    $region13: #{siamese_forward.1} parent=1 // pred_fallthru
      _
    // Predicated region
    $region14: #{siamese_forward.1} parent=1 // pred_check
      _
    $region15: #{siamese_forward.1} parent=1 // pred_check_branch
      %33 = sbr.rel (0) target = $region17
    $region16: #{siamese_forward.1} parent=1 // pred_region
      _
    $region17: #{siamese_forward.1} parent=1 // pred_fallthru
      _
    // Predicated region
    $region18: #{siamese_forward.1} parent=1 // pred_check
      _
    $region19: #{siamese_forward.1} parent=1 // pred_check_branch
      %35 = sbr.rel (0) target = $region21
    $region20: #{siamese_forward.1} parent=1 // pred_region
      _
    $region21: #{siamese_forward.1} parent=1 // pred_fallthru
      _
    // Predicated region
    $region22: #{siamese_forward.1} parent=1 // pred_check
      _
    $region23: #{siamese_forward.1} parent=1 // pred_check_branch
      %37 = sbr.rel (0) target = $region25
    $region24: #{siamese_forward.1} parent=1 // pred_region
      _
    $region25: #{siamese_forward.1} parent=1 // pred_fallthru
      _
    // Predicated region
    $region26: #{siamese_forward.1} parent=1 // pred_check
      _
    $region27: #{siamese_forward.1} parent=1 // pred_check_branch
      %39 = sbr.rel (0) target = $region29
    $region28: #{siamese_forward.1} parent=1 // pred_region
      %40 = dma.done [#allocation3], 512
    $region29: #{siamese_forward.1} parent=1 // pred_fallthru
      _
    %v41 = vld [vmem:[#allocation2] sm:$0xff]
    %v42 = vld [vmem:[#allocation2 + $0x8] sm:$0xff]
    %v43 = vld [vmem:[#allocation2 + $0x10] sm:$0xff]
    %v44 = vld [vmem:[#allocation2 + $0x18] sm:$0xff]
    %v45 = vld [vmem:[%s3] sm:$0xff]
    %v46 = vld [vmem:[%s3 + $0x8] sm:$0xff]
    %v47 = vld [vmem:[%s3 + $0x10] sm:$0xff]
    %v48 = vld [vmem:[%s3 + $0x18] sm:$0xff]
    %v49 = vld [vmem:[%s3 + $0x20] sm:$0xff]
    %v50 = vld [vmem:[%s3 + $0x28] sm:$0xff]
    %v51 = vld [vmem:[%s3 + $0x30] sm:$0xff]
    %v52 = vld [vmem:[%s3 + $0x38] sm:$0xff]
    %v53 = vld [vmem:[%s4] sm:$0xff]
    %v54 = vld [vmem:[%s4 + $0x8] sm:$0xff]
    %v55 = vld [vmem:[%s4 + $0x10] sm:$0xff]
    %v56 = vld [vmem:[%s4 + $0x18] sm:$0xff]
    %v57 = vld [vmem:[%s4 + $0x20] sm:$0xff]
    %v58 = vld [vmem:[%s4 + $0x28] sm:$0xff]
    %v59 = vld [vmem:[%s4 + $0x30] sm:$0xff]
    %v60 = vld [vmem:[%s4 + $0x38] sm:$0xff]
    %v61 = vld [vmem:[%s5] sm:$0x1]
    %v62 = vld [vmem:[%s5 + $0x1] sm:$0x1]
    %v63 = vld [vmem:[%s5 + $0x2] sm:$0x1]
    %v64 = vld [vmem:[%s0] sm:$0xff]
    %v65 = vlaneseq
    %v66 = vshrl.u32 %v65, 7
    %v67 = vsub.s32 0, %v66
    %v68 = vrot.slane %v61, %v67
    %vm69 = vcmask 261120
    %v71 = vsel %vm69, %v64, 0
    %73 = vmatprep.subr.mxu0 0.0
    %74 = vmatpush1.msra.mxu0 %v41
    %75 = vmatprep.subr.mxu0 0.0
    %76 = vmatpush1.msra.mxu0 %v42
    %77 = vmatprep.subr.mxu0 0.0
    %78 = vmatpush1.msra.mxu0 %v43
    %79 = vmatprep.subr.mxu0 0.0
    %80 = vmatpush1.msra.mxu0 %v44
    %81 = vmatprep.subr.mxu0 0.0
    %82 = vmatpush1.msra.mxu0 0.0
    %83 = vmatprep.subr.mxu0 0.0
    %84 = vmatpush1.msra.mxu0 0.0
    %85 = vmatprep.subr.mxu0 0.0
    %86 = vmatpush1.msra.mxu0 0.0
    %87 = vmatprep.subr.mxu0 0.0
    %88 = vmatpush1.msra.mxu0 0.0
    %89 = vmatprep.subr.mxu0 0.0
    %90 = vmatpush1.msra.mxu0 0.0
    %91 = vmatprep.subr.mxu0 0.0
    %92 = vmatpush1.msra.mxu0 0.0
    %93 = vmatprep.subr.mxu0 0.0
    %94 = vmatpush1.msra.mxu0 0.0
    %95 = vmatprep.subr.mxu0 0.0
    %96 = vmatpush1.msra.mxu0 0.0
    %97 = vmatprep.subr.mxu0 0.0
    %98 = vmatpush1.msra.mxu0 0.0
    %99 = vmatprep.subr.mxu0 0.0
    %100 = vmatpush1.msra.mxu0 0.0
    %101 = vmatprep.subr.mxu0 0.0
    %102 = vmatpush1.msra.mxu0 0.0
    %103 = vmatprep.subr.mxu0 0.0
    %104 = vmatpush1.msra.mxu0 0.0
    %105 = vmatprep.subr.mxu0 0.0
    %106 = vmatpush1.msra.mxu0 0.0
    %107 = vmatprep.subr.mxu0 0.0
    %108 = vmatpush1.msra.mxu0 0.0
    %109 = vmatprep.subr.mxu0 0.0
    %110 = vmatpush1.msra.mxu0 0.0
    %111 = vmatprep.subr.mxu0 0.0
    %112 = vmatpush1.msra.mxu0 0.0
    %113 = vmatprep.subr.mxu0 0.0
    %114 = vmatpush1.msra.mxu0 0.0
    %115 = vmatprep.subr.mxu0 0.0
    %116 = vmatpush1.msra.mxu0 0.0
    %117 = vmatprep.subr.mxu0 0.0
    %118 = vmatpush1.msra.mxu0 0.0
    %119 = vmatprep.subr.mxu0 0.0
    %120 = vmatpush1.msra.mxu0 0.0
    %121 = vmatprep.subr.mxu0 0.0
    %122 = vmatpush1.msra.mxu0 0.0
    %123 = vmatprep.subr.mxu0 0.0
    %124 = vmatpush1.msra.mxu0 0.0
    %125 = vmatprep.subr.mxu0 0.0
    %126 = vmatpush1.msra.mxu0 0.0
    %127 = vmatprep.subr.mxu0 0.0
    %128 = vmatpush1.msra.mxu0 0.0
    %129 = vmatprep.subr.mxu0 0.0
    %130 = vmatpush1.msra.mxu0 0.0
    %131 = vmatprep.subr.mxu0 0.0
    %132 = vmatpush1.msra.mxu0 0.0
    %133 = vmatprep.subr.mxu0 0.0
    %134 = vmatpush1.msra.mxu0 0.0
    %135 = vmatprep.subr.mxu0 0.0
    %136 = vmatpush1.msra.mxu0 0.0
    %137 = vmatprep.mubr.f32.mxu0 0.0
    %138 = vmatmul.mubr.f32.gmra.mrb[0].mxu0 %v71
    %v139 = vpop.f32.mrb[0].mxu0
    %v140 = vadd.f32 %v68, %v139
    %v141 = vpop.f32.mrb[0].mxu0
    %142 = vdwg.mxu0
    %v143 = vmax.f32 %v140, 0.0
    %v144 = vlaneseq
    %v145 = vshrl.u32 %v144, 7
    %v146 = vsub.s32 0, %v145
    %v147 = vrot.slane %v62, %v146
    %vm148 = vcmask 523264
    %v150 = vsel %vm148, %v143, 0
    %152 = vmatprep.subr.mxu0 0.0
    %153 = vmatpush1.msra.mxu0 %v45
    %154 = vmatprep.subr.mxu0 0.0
    %155 = vmatpush1.msra.mxu0 %v46
    %156 = vmatprep.subr.mxu0 0.0
    %157 = vmatpush1.msra.mxu0 %v47
    %158 = vmatprep.subr.mxu0 0.0
    %159 = vmatpush1.msra.mxu0 %v48
    %160 = vmatprep.subr.mxu0 0.0
    %161 = vmatpush1.msra.mxu0 %v49
    %162 = vmatprep.subr.mxu0 0.0
    %163 = vmatpush1.msra.mxu0 %v50
    %164 = vmatprep.subr.mxu0 0.0
    %165 = vmatpush1.msra.mxu0 %v51
    %166 = vmatprep.subr.mxu0 0.0
    %167 = vmatpush1.msra.mxu0 %v52
    %168 = vmatprep.subr.mxu0 0.0
    %169 = vmatpush1.msra.mxu0 0.0
    %170 = vmatprep.subr.mxu0 0.0
    %171 = vmatpush1.msra.mxu0 0.0
    %172 = vmatprep.subr.mxu0 0.0
    %173 = vmatpush1.msra.mxu0 0.0
    %174 = vmatprep.subr.mxu0 0.0
    %175 = vmatpush1.msra.mxu0 0.0
    %176 = vmatprep.subr.mxu0 0.0
    %177 = vmatpush1.msra.mxu0 0.0
    %178 = vmatprep.subr.mxu0 0.0
    %179 = vmatpush1.msra.mxu0 0.0
    %180 = vmatprep.subr.mxu0 0.0
    %181 = vmatpush1.msra.mxu0 0.0
    %182 = vmatprep.subr.mxu0 0.0
    %183 = vmatpush1.msra.mxu0 0.0
    %184 = vmatprep.subr.mxu0 0.0
    %185 = vmatpush1.msra.mxu0 0.0
    %186 = vmatprep.subr.mxu0 0.0
    %187 = vmatpush1.msra.mxu0 0.0
    %188 = vmatprep.subr.mxu0 0.0
    %189 = vmatpush1.msra.mxu0 0.0
    %190 = vmatprep.subr.mxu0 0.0
    %191 = vmatpush1.msra.mxu0 0.0
    %192 = vmatprep.subr.mxu0 0.0
    %193 = vmatpush1.msra.mxu0 0.0
    %194 = vmatprep.subr.mxu0 0.0
    %195 = vmatpush1.msra.mxu0 0.0
    %196 = vmatprep.subr.mxu0 0.0
    %197 = vmatpush1.msra.mxu0 0.0
    %198 = vmatprep.subr.mxu0 0.0
    %199 = vmatpush1.msra.mxu0 0.0
    %200 = vmatprep.subr.mxu0 0.0
    %201 = vmatpush1.msra.mxu0 0.0
    %202 = vmatprep.subr.mxu0 0.0
    %203 = vmatpush1.msra.mxu0 0.0
    %204 = vmatprep.subr.mxu0 0.0
    %205 = vmatpush1.msra.mxu0 0.0
    %206 = vmatprep.subr.mxu0 0.0
    %207 = vmatpush1.msra.mxu0 0.0
    %208 = vmatprep.subr.mxu0 0.0
    %209 = vmatpush1.msra.mxu0 0.0
    %210 = vmatprep.subr.mxu0 0.0
    %211 = vmatpush1.msra.mxu0 0.0
    %212 = vmatprep.subr.mxu0 0.0
    %213 = vmatpush1.msra.mxu0 0.0
    %214 = vmatprep.subr.mxu0 0.0
    %215 = vmatpush1.msra.mxu0 0.0
    %216 = vmatprep.mubr.f32.mxu0 0.0
    %217 = vmatmul.mubr.f32.gmra.mrb[0].mxu0 %v150
    %v218 = vpop.f32.mrb[0].mxu0
    %v219 = vadd.f32 %v147, %v218
    %v220 = vpop.f32.mrb[0].mxu0
    %221 = vdwg.mxu0
    %v222 = vmax.f32 %v219, 0.0
    %v223 = vlaneseq
    %v224 = vshrl.u32 %v223, 7
    %v225 = vsub.s32 0, %v224
    %v226 = vrot.slane %v63, %v225
    %v228 = vsel %vm148, %v222, 0
    %230 = vmatprep.subr.mxu0 0.0
    %231 = vmatpush1.msra.mxu0 %v53
    %232 = vmatprep.subr.mxu0 0.0
    %233 = vmatpush1.msra.mxu0 %v54
    %234 = vmatprep.subr.mxu0 0.0
    %235 = vmatpush1.msra.mxu0 %v55
    %236 = vmatprep.subr.mxu0 0.0
    %237 = vmatpush1.msra.mxu0 %v56
    %238 = vmatprep.subr.mxu0 0.0
    %239 = vmatpush1.msra.mxu0 %v57
    %240 = vmatprep.subr.mxu0 0.0
    %241 = vmatpush1.msra.mxu0 %v58
    %242 = vmatprep.subr.mxu0 0.0
    %243 = vmatpush1.msra.mxu0 %v59
    %244 = vmatprep.subr.mxu0 0.0
    %245 = vmatpush1.msra.mxu0 %v60
    %246 = vmatprep.subr.mxu0 0.0
    %247 = vmatpush1.msra.mxu0 0.0
    %248 = vmatprep.subr.mxu0 0.0
    %249 = vmatpush1.msra.mxu0 0.0
    %250 = vmatprep.subr.mxu0 0.0
    %251 = vmatpush1.msra.mxu0 0.0
    %252 = vmatprep.subr.mxu0 0.0
    %253 = vmatpush1.msra.mxu0 0.0
    %254 = vmatprep.subr.mxu0 0.0
    %255 = vmatpush1.msra.mxu0 0.0
    %256 = vmatprep.subr.mxu0 0.0
    %257 = vmatpush1.msra.mxu0 0.0
    %258 = vmatprep.subr.mxu0 0.0
    %259 = vmatpush1.msra.mxu0 0.0
    %260 = vmatprep.subr.mxu0 0.0
    %261 = vmatpush1.msra.mxu0 0.0
    %262 = vmatprep.subr.mxu0 0.0
    %263 = vmatpush1.msra.mxu0 0.0
    %264 = vmatprep.subr.mxu0 0.0
    %265 = vmatpush1.msra.mxu0 0.0
    %266 = vmatprep.subr.mxu0 0.0
    %267 = vmatpush1.msra.mxu0 0.0
    %268 = vmatprep.subr.mxu0 0.0
    %269 = vmatpush1.msra.mxu0 0.0
    %270 = vmatprep.subr.mxu0 0.0
    %271 = vmatpush1.msra.mxu0 0.0
    %272 = vmatprep.subr.mxu0 0.0
    %273 = vmatpush1.msra.mxu0 0.0
    %274 = vmatprep.subr.mxu0 0.0
    %275 = vmatpush1.msra.mxu0 0.0
    %276 = vmatprep.subr.mxu0 0.0
    %277 = vmatpush1.msra.mxu0 0.0
    %278 = vmatprep.subr.mxu0 0.0
    %279 = vmatpush1.msra.mxu0 0.0
    %280 = vmatprep.subr.mxu0 0.0
    %281 = vmatpush1.msra.mxu0 0.0
    %282 = vmatprep.subr.mxu0 0.0
    %283 = vmatpush1.msra.mxu0 0.0
    %284 = vmatprep.subr.mxu0 0.0
    %285 = vmatpush1.msra.mxu0 0.0
    %286 = vmatprep.subr.mxu0 0.0
    %287 = vmatpush1.msra.mxu0 0.0
    %288 = vmatprep.subr.mxu0 0.0
    %289 = vmatpush1.msra.mxu0 0.0
    %290 = vmatprep.subr.mxu0 0.0
    %291 = vmatpush1.msra.mxu0 0.0
    %292 = vmatprep.subr.mxu0 0.0
    %293 = vmatpush1.msra.mxu0 0.0
    %294 = vmatprep.mubr.f32.mxu0 0.0
    %295 = vmatmul.mubr.f32.gmra.mrb[0].mxu0 %v228
    %v296 = vpop.f32.mrb[0].mxu0
    %v297 = vadd.f32 %v226, %v296
    %v298 = vpop.f32.mrb[0].mxu0
    %299 = vdwg.mxu0
    %vm300 = vcmask 130048
    %301 = vst.msk [vmem:[#allocation5] sm:$0xff] %vm300, %v297
    %v302 = vld [vmem:[%s1] sm:$0xff]
    %v304 = vsel %vm69, %v302, 0
    %306 = vmatprep.subr.mxu0 0.0
    %307 = vmatpush1.msra.mxu0 %v41
    %308 = vmatprep.subr.mxu0 0.0
    %309 = vmatpush1.msra.mxu0 %v42
    %310 = vmatprep.subr.mxu0 0.0
    %311 = vmatpush1.msra.mxu0 %v43
    %312 = vmatprep.subr.mxu0 0.0
    %313 = vmatpush1.msra.mxu0 %v44
    %314 = vmatprep.subr.mxu0 0.0
    %315 = vmatpush1.msra.mxu0 0.0
    %316 = vmatprep.subr.mxu0 0.0
    %317 = vmatpush1.msra.mxu0 0.0
    %318 = vmatprep.subr.mxu0 0.0
    %319 = vmatpush1.msra.mxu0 0.0
    %320 = vmatprep.subr.mxu0 0.0
    %321 = vmatpush1.msra.mxu0 0.0
    %322 = vmatprep.subr.mxu0 0.0
    %323 = vmatpush1.msra.mxu0 0.0
    %324 = vmatprep.subr.mxu0 0.0
    %325 = vmatpush1.msra.mxu0 0.0
    %326 = vmatprep.subr.mxu0 0.0
    %327 = vmatpush1.msra.mxu0 0.0
    %328 = vmatprep.subr.mxu0 0.0
    %329 = vmatpush1.msra.mxu0 0.0
    %330 = vmatprep.subr.mxu0 0.0
    %331 = vmatpush1.msra.mxu0 0.0
    %332 = vmatprep.subr.mxu0 0.0
    %333 = vmatpush1.msra.mxu0 0.0
    %334 = vmatprep.subr.mxu0 0.0
    %335 = vmatpush1.msra.mxu0 0.0
    %336 = vmatprep.subr.mxu0 0.0
    %337 = vmatpush1.msra.mxu0 0.0
    %338 = vmatprep.subr.mxu0 0.0
    %339 = vmatpush1.msra.mxu0 0.0
    %340 = vmatprep.subr.mxu0 0.0
    %341 = vmatpush1.msra.mxu0 0.0
    %342 = vmatprep.subr.mxu0 0.0
    %343 = vmatpush1.msra.mxu0 0.0
    %344 = vmatprep.subr.mxu0 0.0
    %345 = vmatpush1.msra.mxu0 0.0
    %346 = vmatprep.subr.mxu0 0.0
    %347 = vmatpush1.msra.mxu0 0.0
    %348 = vmatprep.subr.mxu0 0.0
    %349 = vmatpush1.msra.mxu0 0.0
    %350 = vmatprep.subr.mxu0 0.0
    %351 = vmatpush1.msra.mxu0 0.0
    %352 = vmatprep.subr.mxu0 0.0
    %353 = vmatpush1.msra.mxu0 0.0
    %354 = vmatprep.subr.mxu0 0.0
    %355 = vmatpush1.msra.mxu0 0.0
    %356 = vmatprep.subr.mxu0 0.0
    %357 = vmatpush1.msra.mxu0 0.0
    %358 = vmatprep.subr.mxu0 0.0
    %359 = vmatpush1.msra.mxu0 0.0
    %360 = vmatprep.subr.mxu0 0.0
    %361 = vmatpush1.msra.mxu0 0.0
    %362 = vmatprep.subr.mxu0 0.0
    %363 = vmatpush1.msra.mxu0 0.0
    %364 = vmatprep.subr.mxu0 0.0
    %365 = vmatpush1.msra.mxu0 0.0
    %366 = vmatprep.subr.mxu0 0.0
    %367 = vmatpush1.msra.mxu0 0.0
    %368 = vmatprep.subr.mxu0 0.0
    %369 = vmatpush1.msra.mxu0 0.0
    %370 = vmatprep.mubr.f32.mxu0 0.0
    %371 = vmatmul.mubr.f32.gmra.mrb[0].mxu0 %v304
    %v372 = vpop.f32.mrb[0].mxu0
    %v373 = vadd.f32 %v68, %v372
    %v374 = vpop.f32.mrb[0].mxu0
    %375 = vdwg.mxu0
    %v376 = vmax.f32 %v373, 0.0
    %v378 = vsel %vm148, %v376, 0
    %380 = vmatprep.subr.mxu0 0.0
    %381 = vmatpush1.msra.mxu0 %v45
    %382 = vmatprep.subr.mxu0 0.0
    %383 = vmatpush1.msra.mxu0 %v46
    %384 = vmatprep.subr.mxu0 0.0
    %385 = vmatpush1.msra.mxu0 %v47
    %386 = vmatprep.subr.mxu0 0.0
    %387 = vmatpush1.msra.mxu0 %v48
    %388 = vmatprep.subr.mxu0 0.0
    %389 = vmatpush1.msra.mxu0 %v49
    %390 = vmatprep.subr.mxu0 0.0
    %391 = vmatpush1.msra.mxu0 %v50
    %392 = vmatprep.subr.mxu0 0.0
    %393 = vmatpush1.msra.mxu0 %v51
    %394 = vmatprep.subr.mxu0 0.0
    %395 = vmatpush1.msra.mxu0 %v52
    %396 = vmatprep.subr.mxu0 0.0
    %397 = vmatpush1.msra.mxu0 0.0
    %398 = vmatprep.subr.mxu0 0.0
    %399 = vmatpush1.msra.mxu0 0.0
    %400 = vmatprep.subr.mxu0 0.0
    %401 = vmatpush1.msra.mxu0 0.0
    %402 = vmatprep.subr.mxu0 0.0
    %403 = vmatpush1.msra.mxu0 0.0
    %404 = vmatprep.subr.mxu0 0.0
    %405 = vmatpush1.msra.mxu0 0.0
    %406 = vmatprep.subr.mxu0 0.0
    %407 = vmatpush1.msra.mxu0 0.0
    %408 = vmatprep.subr.mxu0 0.0
    %409 = vmatpush1.msra.mxu0 0.0
    %410 = vmatprep.subr.mxu0 0.0
    %411 = vmatpush1.msra.mxu0 0.0
    %412 = vmatprep.subr.mxu0 0.0
    %413 = vmatpush1.msra.mxu0 0.0
    %414 = vmatprep.subr.mxu0 0.0
    %415 = vmatpush1.msra.mxu0 0.0
    %416 = vmatprep.subr.mxu0 0.0
    %417 = vmatpush1.msra.mxu0 0.0
    %418 = vmatprep.subr.mxu0 0.0
    %419 = vmatpush1.msra.mxu0 0.0
    %420 = vmatprep.subr.mxu0 0.0
    %421 = vmatpush1.msra.mxu0 0.0
    %422 = vmatprep.subr.mxu0 0.0
    %423 = vmatpush1.msra.mxu0 0.0
    %424 = vmatprep.subr.mxu0 0.0
    %425 = vmatpush1.msra.mxu0 0.0
    %426 = vmatprep.subr.mxu0 0.0
    %427 = vmatpush1.msra.mxu0 0.0
    %428 = vmatprep.subr.mxu0 0.0
    %429 = vmatpush1.msra.mxu0 0.0
    %430 = vmatprep.subr.mxu0 0.0
    %431 = vmatpush1.msra.mxu0 0.0
    %432 = vmatprep.subr.mxu0 0.0
    %433 = vmatpush1.msra.mxu0 0.0
    %434 = vmatprep.subr.mxu0 0.0
    %435 = vmatpush1.msra.mxu0 0.0
    %436 = vmatprep.subr.mxu0 0.0
    %437 = vmatpush1.msra.mxu0 0.0
    %438 = vmatprep.subr.mxu0 0.0
    %439 = vmatpush1.msra.mxu0 0.0
    %440 = vmatprep.subr.mxu0 0.0
    %441 = vmatpush1.msra.mxu0 0.0
    %442 = vmatprep.subr.mxu0 0.0
    %443 = vmatpush1.msra.mxu0 0.0
    %444 = vmatprep.mubr.f32.mxu0 0.0
    %445 = vmatmul.mubr.f32.gmra.mrb[0].mxu0 %v378
    %v446 = vpop.f32.mrb[0].mxu0
    %v447 = vadd.f32 %v147, %v446
    %v448 = vpop.f32.mrb[0].mxu0
    %449 = vdwg.mxu0
    %v450 = vmax.f32 %v447, 0.0
    %v452 = vsel %vm148, %v450, 0
    %454 = vmatprep.subr.mxu0 0.0
    %455 = vmatpush1.msra.mxu0 %v53
    %456 = vmatprep.subr.mxu0 0.0
    %457 = vmatpush1.msra.mxu0 %v54
    %458 = vmatprep.subr.mxu0 0.0
    %459 = vmatpush1.msra.mxu0 %v55
    %460 = vmatprep.subr.mxu0 0.0
    %461 = vmatpush1.msra.mxu0 %v56
    %462 = vmatprep.subr.mxu0 0.0
    %463 = vmatpush1.msra.mxu0 %v57
    %464 = vmatprep.subr.mxu0 0.0
    %465 = vmatpush1.msra.mxu0 %v58
    %466 = vmatprep.subr.mxu0 0.0
    %467 = vmatpush1.msra.mxu0 %v59
    %468 = vmatprep.subr.mxu0 0.0
    %469 = vmatpush1.msra.mxu0 %v60
    %470 = vmatprep.subr.mxu0 0.0
    %471 = vmatpush1.msra.mxu0 0.0
    %472 = vmatprep.subr.mxu0 0.0
    %473 = vmatpush1.msra.mxu0 0.0
    %474 = vmatprep.subr.mxu0 0.0
    %475 = vmatpush1.msra.mxu0 0.0
    %476 = vmatprep.subr.mxu0 0.0
    %477 = vmatpush1.msra.mxu0 0.0
    %478 = vmatprep.subr.mxu0 0.0
    %479 = vmatpush1.msra.mxu0 0.0
    %480 = vmatprep.subr.mxu0 0.0
    %481 = vmatpush1.msra.mxu0 0.0
    %482 = vmatprep.subr.mxu0 0.0
    %483 = vmatpush1.msra.mxu0 0.0
    %484 = vmatprep.subr.mxu0 0.0
    %485 = vmatpush1.msra.mxu0 0.0
    %486 = vmatprep.subr.mxu0 0.0
    %487 = vmatpush1.msra.mxu0 0.0
    %488 = vmatprep.subr.mxu0 0.0
    %489 = vmatpush1.msra.mxu0 0.0
    %490 = vmatprep.subr.mxu0 0.0
    %491 = vmatpush1.msra.mxu0 0.0
    %492 = vmatprep.subr.mxu0 0.0
    %493 = vmatpush1.msra.mxu0 0.0
    %494 = vmatprep.subr.mxu0 0.0
    %495 = vmatpush1.msra.mxu0 0.0
    %496 = vmatprep.subr.mxu0 0.0
    %497 = vmatpush1.msra.mxu0 0.0
    %498 = vmatprep.subr.mxu0 0.0
    %499 = vmatpush1.msra.mxu0 0.0
    %500 = vmatprep.subr.mxu0 0.0
    %501 = vmatpush1.msra.mxu0 0.0
    %502 = vmatprep.subr.mxu0 0.0
    %503 = vmatpush1.msra.mxu0 0.0
    %504 = vmatprep.subr.mxu0 0.0
    %505 = vmatpush1.msra.mxu0 0.0
    %506 = vmatprep.subr.mxu0 0.0
    %507 = vmatpush1.msra.mxu0 0.0
    %508 = vmatprep.subr.mxu0 0.0
    %509 = vmatpush1.msra.mxu0 0.0
    %510 = vmatprep.subr.mxu0 0.0
    %511 = vmatpush1.msra.mxu0 0.0
    %512 = vmatprep.subr.mxu0 0.0
    %513 = vmatpush1.msra.mxu0 0.0
    %514 = vmatprep.subr.mxu0 0.0
    %515 = vmatpush1.msra.mxu0 0.0
    %516 = vmatprep.subr.mxu0 0.0
    %517 = vmatpush1.msra.mxu0 0.0
    %518 = vmatprep.mubr.f32.mxu0 0.0
    %519 = vmatmul.mubr.f32.gmra.mrb[0].mxu0 %v452
    %v520 = vpop.f32.mrb[0].mxu0
    %v521 = vadd.f32 %v226, %v520
    %v522 = vpop.f32.mrb[0].mxu0
    %523 = vdwg.mxu0
    %524 = vst.msk [vmem:[#allocation6] sm:$0xff] %vm300, %v521
    // Predicated region
    $region30: #{siamese_forward.1} parent=1 // pred_check
      _
    $region31: #{siamese_forward.1} parent=1 // pred_check_branch
      %526 = sbr.rel (0) target = $region33
    $region32: #{siamese_forward.1} parent=1 // pred_region
      %s528 = ssub.s32 128, 128
      %529 = vsyncadd [#allocation4], %s528
      %s531 = sshll.u32 [#allocation5], 4
      %s532 = int_to_ptr.vmem [resolvable:$true] %s531
      %534 = dma.vmem_to_hbm [thread:$0]  %s532, 128, %s6, [#allocation4]
    $region33: #{siamese_forward.1} parent=1 // pred_fallthru
      _
    // Predicated region
    $region34: #{siamese_forward.1} parent=1 // pred_check
      _
    $region35: #{siamese_forward.1} parent=1 // pred_check_branch
      %536 = sbr.rel (0) target = $region37
    $region36: #{siamese_forward.1} parent=1 // pred_region
      %s538 = ssub.s32 128, 128
      %539 = vsyncadd [#allocation7], %s538
      %s541 = sshll.u32 [#allocation6], 4
      %s542 = int_to_ptr.vmem [resolvable:$true] %s541
      %544 = dma.vmem_to_hbm [thread:$0]  %s542, 128, %s7, [#allocation7]
    $region37: #{siamese_forward.1} parent=1 // pred_fallthru
      _
    // Predicated region
    $region38: #{siamese_forward.1} parent=1 // pred_check
      _
    $region39: #{siamese_forward.1} parent=1 // pred_check_branch
      %546 = sbr.rel (0) target = $region41
    $region40: #{siamese_forward.1} parent=1 // pred_region
      %547 = dma.done [#allocation4], 128
    $region41: #{siamese_forward.1} parent=1 // pred_fallthru
      _
    // Predicated region
    $region42: #{siamese_forward.1} parent=1 // pred_check
      _
    $region43: #{siamese_forward.1} parent=1 // pred_check_branch
      %549 = sbr.rel (0) target = $region45
    $region44: #{siamese_forward.1} parent=1 // pred_region
      %550 = dma.done [#allocation7], 128
    $region45: #{siamese_forward.1} parent=1 // pred_fallthru
      _
    %551 = vsyncpa [#allocation3], 1
    %552 = vsyncpa [#allocation4], 1
    %553 = vsyncpa [#allocation7], 1

</llo_original>
